<compile_context>
chip_gen: v5e
topology: v5e:2x2
jax: 0.10.0
libtpu: 0.0.40
codegen_flags: <defaults>
</compile_context>

<pallas_src>
import math
import functools

import jax
import jax.numpy as jnp
from jax import lax
from jax.experimental import pallas as pl
from jax.experimental.pallas import tpu as pltpu


# Finite "minus infinity": avoids inf-inf -> NaN corners in the online softmax.
MASK_VALUE = -1e30


# ----------------------------------------------------------------------------
# Fused kernel body.  Grid = (batch, q_tile, head, k_tile); k_tile innermost.
# ----------------------------------------------------------------------------
def _fused_mha_kernel(xq_ref, xk_ref, xv_ref,
                      wq_ref, bq_ref, wk_ref, bk_ref, wv_ref, bv_ref,
                      wo_ref, bo_ref, out_ref,
                      q_scr, m_scr, l_scr, acc_scr, o_scr,
                      *, scale, causal, tq, tk):
    h_i = pl.program_id(2)
    k_i = pl.program_id(3)
    n_h = pl.num_programs(2)
    n_k = pl.num_programs(3)

    # ---- once per (batch, q_tile, head): project the Q tile, reset flash state
    @pl.when(k_i == 0)
    def _init_head():
        q = jnp.dot(xq_ref[0], wq_ref[0], preferred_element_type=jnp.float32)
        # fold the 1/sqrt(head_dim) softmax scale into Q once (cheap, O(TQ*hd))
        q_scr[...] = (q + bq_ref[0]) * scale
        m_scr[...] = jnp.full(m_scr.shape, MASK_VALUE, jnp.float32)
        l_scr[...] = jnp.zeros(l_scr.shape, jnp.float32)
        acc_scr[...] = jnp.zeros(acc_scr.shape, jnp.float32)

    # ---- project this head's K / V tile (dense contraction over model_dim)
    k = jnp.dot(xk_ref[0], wk_ref[0], preferred_element_type=jnp.float32) + bk_ref[0]
    v = jnp.dot(xv_ref[0], wv_ref[0], preferred_element_type=jnp.float32) + bv_ref[0]

    # ---- scores = q @ k^T as an NT dot_general (no explicit transpose / .T)
    s = lax.dot_general(q_scr[...], k, (((1,), (1,)), ((), ())),
                        preferred_element_type=jnp.float32)          # (TQ, TK)

    if causal:
        q_i = pl.program_id(1)
        row = q_i * tq + lax.broadcasted_iota(jnp.int32, (tq, tk), 0)
        col = k_i * tk + lax.broadcasted_iota(jnp.int32, (tq, tk), 1)
        s = jnp.where(col <= row, s, MASK_VALUE)

    # ---- online-softmax (flash) accumulation over k tiles
    m_prev = m_scr[...]
    m_new = jnp.maximum(m_prev, jnp.max(s, axis=-1, keepdims=True))
    alpha = jnp.exp(m_prev - m_new)
    p = jnp.exp(s - m_new)
    l_scr[...] = alpha * l_scr[...] + jnp.sum(p, axis=-1, keepdims=True)
    # p cast to the value dtype keeps bf16 MXU operands when inputs are bf16;
    # accumulation stays f32 via preferred_element_type.
    acc_scr[...] = alpha * acc_scr[...] + jnp.dot(
        p.astype(v.dtype), v, preferred_element_type=jnp.float32)
    m_scr[...] = m_new

    # ---- last k tile: normalize this head and fold it into the out-projection
    last_k = k_i == n_k - 1

    @pl.when(last_k & (h_i == 0))
    def _zero_out_acc():
        o_scr[...] = jnp.zeros(o_scr.shape, jnp.float32)

    @pl.when(last_k)
    def _finalize_head():
        inv_l = pl.reciprocal(l_scr[...], approx=True)        # EUP slot
        inv_l = inv_l * (2.0 - l_scr[...] * inv_l)            # one Newton step
        o_h = acc_scr[...] * inv_l                            # (TQ, hd)
        o_scr[...] += jnp.dot(o_h.astype(wo_ref.dtype), wo_ref[0],
                              preferred_element_type=jnp.float32)   # (TQ, D)

    @pl.when(last_k & (h_i == n_h - 1))
    def _write_output():
        out_ref[0] = (o_scr[...] + bo_ref[...]).astype(out_ref.dtype)


# ----------------------------------------------------------------------------
# Wrapper: head-major parameter views, BlockSpecs, grid, cost estimate.
# ----------------------------------------------------------------------------
def _pick_tile(s, target=256):
    """Largest tile <= target that divides s and keeps the sublane dim 8-aligned."""
    if s <= target:
        return s
    for t in range(target, 7, -1):
        if s % t == 0 and t % 8 == 0:
            return t
    return s


def attention_layer_pallas(query, key, value, params, *, num_heads, mask=False):
    wq, bq, wk, bk, wv, bv, wo, bo = params
    batch, s_q, d_model = query.shape
    s_k = key.shape[1]
    if d_model % num_heads != 0:
        raise ValueError("model_dim must be divisible by num_heads")
    head_dim = d_model // num_heads
    scale = 1.0 / math.sqrt(head_dim)

    tq = _pick_tile(s_q)
    tk = _pick_tile(s_k)
    n_q = s_q // tq
    n_k = s_k // tk
    grid = (batch, n_q, num_heads, n_k)

    # Head-major parameter views (layout plumbing done once, outside the kernel):
    #   Wq[h] = Wq[:, h*hd:(h+1)*hd],  Wo[h] = Wo[h*hd:(h+1)*hd, :]
    wq3 = jnp.transpose(wq.reshape(d_model, num_heads, head_dim), (1, 0, 2))
    wk3 = jnp.transpose(wk.reshape(d_model, num_heads, head_dim), (1, 0, 2))
    wv3 = jnp.transpose(wv.reshape(d_model, num_heads, head_dim), (1, 0, 2))
    wo3 = wo.reshape(num_heads, head_dim, d_model)
    bq3 = bq.reshape(num_heads, 1, head_dim)
    bk3 = bk.reshape(num_heads, 1, head_dim)
    bv3 = bv.reshape(num_heads, 1, head_dim)
    bo2 = bo.reshape(1, d_model)

    kernel = functools.partial(_fused_mha_kernel, scale=scale, causal=mask,
                               tq=tq, tk=tk)

    w_head_spec = pl.BlockSpec((1, d_model, head_dim), lambda b, qi, h, ki: (h, 0, 0))
    b_head_spec = pl.BlockSpec((1, 1, head_dim), lambda b, qi, h, ki: (h, 0, 0))

    itemsize = jnp.dtype(query.dtype).itemsize
    flops = int(2 * batch * s_q * d_model * d_model                 # Q proj
                + 4 * batch * n_q * s_k * d_model * d_model         # K/V proj
                + 4 * batch * num_heads * s_q * s_k * head_dim      # scores + PV
                + 2 * batch * s_q * d_model * d_model)              # out proj
    transcendentals = int(batch * num_heads * s_q * s_k)
    bytes_accessed = int(itemsize * (2 * batch * s_q * d_model
                                     + 2 * batch * s_k * d_model)
                         + 4 * 4 * d_model * d_model)

    return pl.pallas_call(
        kernel,
        out_shape=jax.ShapeDtypeStruct((batch, s_q, d_model), query.dtype),
        grid_spec=pltpu.PrefetchScalarGridSpec(
            num_scalar_prefetch=0,
            grid=grid,
            in_specs=[
                pl.BlockSpec((1, tq, d_model), lambda b, qi, h, ki: (b, qi, 0)),  # query
                pl.BlockSpec((1, tk, d_model), lambda b, qi, h, ki: (b, ki, 0)),  # key
                pl.BlockSpec((1, tk, d_model), lambda b, qi, h, ki: (b, ki, 0)),  # value
                w_head_spec, b_head_spec,      # FC_Q  (per-head slice)
                w_head_spec, b_head_spec,      # FC_K
                w_head_spec, b_head_spec,      # FC_V
                pl.BlockSpec((1, head_dim, d_model), lambda b, qi, h, ki: (h, 0, 0)),  # Wo[h]
                pl.BlockSpec((1, d_model), lambda b, qi, h, ki: (0, 0)),               # bo
            ],
            out_specs=pl.BlockSpec((1, tq, d_model), lambda b, qi, h, ki: (b, qi, 0)),
            scratch_shapes=[
                pltpu.VMEM((tq, head_dim), jnp.float32),   # projected/scaled Q tile
                pltpu.VMEM((tq, 1), jnp.float32),          # running max  (m)
                pltpu.VMEM((tq, 1), jnp.float32),          # running denom (l)
                pltpu.VMEM((tq, head_dim), jnp.float32),   # running numerator
                pltpu.VMEM((tq, d_model), jnp.float32),    # out-proj accumulator
            ],
        ),
        compiler_params=pltpu.CompilerParams(
            dimension_semantics=("parallel", "parallel", "arbitrary", "arbitrary"),
            vmem_limit_bytes=48 * 1024 * 1024,
        ),
        cost_estimate=pl.CostEstimate(flops=flops,
                                      transcendentals=transcendentals,
                                      bytes_accessed=bytes_accessed),
    )(query, key, value, wq3, bq3, wk3, bk3, wv3, bv3, wo3, bo2)
    # TODO(synk): if d_model < 128 a lane-dense (padded) output layout would
    # further speed up the store path; not needed for correctness.


# ----------------------------------------------------------------------------
# Plain-JAX reference (mirrors the PyTorch forward exactly, including the
# split/cat head trick) for correctness checking.
# ----------------------------------------------------------------------------
def attention_layer_ref(query, key, value, params, *, num_heads, mask=False):
    wq, bq, wk, bk, wv, bv, wo, bo = params
    d_model = query.shape[-1]
    head_dim = d_model // num_heads

    q = query @ wq + bq
    k = key @ wk + bk
    v = value @ wv + bv

    # torch.cat(torch.split(x, head_dim, dim=-1), dim=0)
    q = jnp.concatenate(jnp.split(q, num_heads, axis=-1), axis=0)
    k = jnp.concatenate(jnp.split(k, num_heads, axis=-1), axis=0)
    v = jnp.concatenate(jnp.split(v, num_heads, axis=-1), axis=0)

    scores = q @ jnp.swapaxes(k, -1, -2) / math.sqrt(head_dim)
    if mask:
        tgt, src = scores.shape[-2], scores.shape[-1]
        keep = jnp.tril(jnp.ones((tgt, src), dtype=bool))
        scores = jnp.where(keep, scores, -jnp.inf)
    attn = jax.nn.softmax(scores, axis=-1)
    out = attn @ v
    out = jnp.concatenate(jnp.split(out, num_heads, axis=0), axis=-1)
    return out @ wo + bo


# ----------------------------------------------------------------------------
def _init_params(key, d_model):
    """Deterministic torch.nn.Linear-style init: U(-1/sqrt(D), 1/sqrt(D))."""
    bound = 1.0 / math.sqrt(d_model)
    keys = jax.random.split(key, 8)
    def w(k): return jax.random.uniform(k, (d_model, d_model), jnp.float32,
                                        -bound, bound)
    def b(k): return jax.random.uniform(k, (d_model,), jnp.float32,
                                        -bound, bound)
    return (w(keys[0]), b(keys[1]),   # FC_Q
            w(keys[2]), b(keys[3]),   # FC_K
            w(keys[4]), b(keys[5]),   # FC_V
            w(keys[6]), b(keys[7]))   # out_proj


if __name__ == "__main__":
    model_dim = 32
    num_heads = 8
    batch = 2
    seq = 8

    root = jax.random.PRNGKey(0)
    k_q, k_k, k_v, k_p = jax.random.split(root, 4)

    query = jax.random.normal(k_q, (batch, seq, model_dim), jnp.float32)
    key_t = jax.random.normal(k_k, (batch, seq, model_dim), jnp.float32)
    value = jax.random.normal(k_v, (batch, seq, model_dim), jnp.float32)
    params = _init_params(k_p, model_dim)

    ok = True
    for use_mask in (False, True):
        out = attention_layer_pallas(query, key_t, value, params,
                                     num_heads=num_heads, mask=use_mask)
        out = jax.block_until_ready(out)
        ref = attention_layer_ref(query, key_t, value, params,
                                  num_heads=num_heads, mask=use_mask)
        if not jnp.allclose(out, ref, atol=1e-3, rtol=1e-3):
            ok = False

    if ok:
        print("KERNEL_OK")
    else:
        print("KERNEL_MISMATCH")
</pallas_src>

<mosaic_0001>
module attributes {stable_mosaic.version = 11 : i64} {
  func.func @_fused_mha_kernel(%arg0: i32, %arg1: i32, %arg2: i32, %arg3: i32, %arg4: memref<1x8x32xf32, #tpu.memory_space<vmem>>, %arg5: memref<1x8x32xf32, #tpu.memory_space<vmem>>, %arg6: memref<1x8x32xf32, #tpu.memory_space<vmem>>, %arg7: memref<1x32x4xf32, #tpu.memory_space<vmem>>, %arg8: memref<1x1x4xf32, #tpu.memory_space<vmem>>, %arg9: memref<1x32x4xf32, #tpu.memory_space<vmem>>, %arg10: memref<1x1x4xf32, #tpu.memory_space<vmem>>, %arg11: memref<1x32x4xf32, #tpu.memory_space<vmem>>, %arg12: memref<1x1x4xf32, #tpu.memory_space<vmem>>, %arg13: memref<1x4x32xf32, #tpu.memory_space<vmem>>, %arg14: memref<1x32xf32, #tpu.memory_space<vmem>>, %arg15: memref<1x8x32xf32, #tpu.memory_space<vmem>>, %arg16: memref<8x4xf32, #tpu.memory_space<vmem>>, %arg17: memref<8x1xf32, #tpu.memory_space<vmem>>, %arg18: memref<8x1xf32, #tpu.memory_space<vmem>>, %arg19: memref<8x4xf32, #tpu.memory_space<vmem>>, %arg20: memref<8x32xf32, #tpu.memory_space<vmem>>) attributes {dimension_semantics = [#tpu.dimension_semantics<parallel>, #tpu.dimension_semantics<parallel>, #tpu.dimension_semantics<arbitrary>, #tpu.dimension_semantics<arbitrary>], iteration_bounds = array<i64: 2, 1, 8, 1>, scalar_prefetch = 0 : i64, scratch_operands = 5 : i64, tpu.core_type = #tpu.core_type<tc>, window_params = [{transform_indices = @transform_0, window_bounds = array<i64: 1, 8, 32>}, {transform_indices = @transform_1, window_bounds = array<i64: 1, 8, 32>}, {transform_indices = @transform_2, window_bounds = array<i64: 1, 8, 32>}, {transform_indices = @transform_3, window_bounds = array<i64: 1, 32, 4>}, {transform_indices = @transform_4, window_bounds = array<i64: 1, 1, 4>}, {transform_indices = @transform_5, window_bounds = array<i64: 1, 32, 4>}, {transform_indices = @transform_6, window_bounds = array<i64: 1, 1, 4>}, {transform_indices = @transform_7, window_bounds = array<i64: 1, 32, 4>}, {transform_indices = @transform_8, window_bounds = array<i64: 1, 1, 4>}, {transform_indices = @transform_9, window_bounds = array<i64: 1, 4, 32>}, {pipeline_mode = #tpu.pipeline_mode<synchronous>, transform_indices = @transform_10, window_bounds = array<i64: 1, 32>}, {transform_indices = @transform_11, window_bounds = array<i64: 1, 8, 32>}]} {
    %c0_i32 = arith.constant 0 : i32
    %0 = arith.cmpi eq, %arg3, %c0_i32 : i32
    %1 = arith.extui %0 : i1 to i32
    %c0_i32_0 = arith.constant 0 : i32
    %2 = arith.cmpi ne, %1, %c0_i32_0 : i32
    scf.if %2 {
      %c0_42 = arith.constant 0 : index
      %c0_43 = arith.constant 0 : index
      %c0_44 = arith.constant 0 : index
      %56 = vector.load %arg4[%c0_42, %c0_43, %c0_44] : memref<1x8x32xf32, #tpu.memory_space<vmem>>, vector<1x8x32xf32>
      %57 = vector.shape_cast %56 : vector<1x8x32xf32> to vector<8x32xf32>
      %c0_45 = arith.constant 0 : index
      %c0_46 = arith.constant 0 : index
      %c0_47 = arith.constant 0 : index
      %58 = vector.load %arg7[%c0_45, %c0_46, %c0_47] : memref<1x32x4xf32, #tpu.memory_space<vmem>>, vector<1x32x4xf32>
      %59 = vector.shape_cast %58 : vector<1x32x4xf32> to vector<32x4xf32>
      %cst_48 = arith.constant dense<0.000000e+00> : vector<8x4xf32>
      %60 = tpu.matmul %57, %59, %cst_48 {dimension_numbers = #tpu.dot_dimension_numbers<[1], [0], [0], [1], [0, 0, 1, 1], [], []>} : vector<8x32xf32>, vector<32x4xf32>, vector<8x4xf32> -> vector<8x4xf32>
      %c0_49 = arith.constant 0 : index
      %c0_50 = arith.constant 0 : index
      %c0_51 = arith.constant 0 : index
      %61 = vector.load %arg8[%c0_49, %c0_50, %c0_51] : memref<1x1x4xf32, #tpu.memory_space<vmem>>, vector<1x1x4xf32>
      %62 = vector.shape_cast %61 : vector<1x1x4xf32> to vector<1x4xf32>
      %63 = vector.broadcast %62 : vector<1x4xf32> to vector<8x4xf32>
      %64 = arith.addf %60, %63 : vector<8x4xf32>
      %cst_52 = arith.constant 5.000000e-01 : f32
      %65 = vector.broadcast %cst_52 : f32 to vector<8x4xf32>
      %66 = arith.mulf %64, %65 : vector<8x4xf32>
      %c0_53 = arith.constant 0 : index
      %c0_54 = arith.constant 0 : index
      %67 = vector.load %arg16[%c0_53, %c0_54] : memref<8x4xf32, #tpu.memory_space<vmem>>, vector<8x4xf32>
      tpu.vector_store %arg16[%c0_53, %c0_54], %66 {strides = array<i32>} : memref<8x4xf32, #tpu.memory_space<vmem>>, vector<8x4xf32>,
      %cst_55 = arith.constant -1.000000e+30 : f32
      %68 = vector.broadcast %cst_55 : f32 to vector<8x1xf32>
      %c0_56 = arith.constant 0 : index
      %c0_57 = arith.constant 0 : index
      %69 = vector.load %arg17[%c0_56, %c0_57] : memref<8x1xf32, #tpu.memory_space<vmem>>, vector<8x1xf32>
      tpu.vector_store %arg17[%c0_56, %c0_57], %68 {strides = array<i32>} : memref<8x1xf32, #tpu.memory_space<vmem>>, vector<8x1xf32>,
      %cst_58 = arith.constant 0.000000e+00 : f32
      %70 = vector.broadcast %cst_58 : f32 to vector<8x1xf32>
      %c0_59 = arith.constant 0 : index
      %c0_60 = arith.constant 0 : index
      %71 = vector.load %arg18[%c0_59, %c0_60] : memref<8x1xf32, #tpu.memory_space<vmem>>, vector<8x1xf32>
      tpu.vector_store %arg18[%c0_59, %c0_60], %70 {strides = array<i32>} : memref<8x1xf32, #tpu.memory_space<vmem>>, vector<8x1xf32>,
      %cst_61 = arith.constant 0.000000e+00 : f32
      %72 = vector.broadcast %cst_61 : f32 to vector<8x4xf32>
      %c0_62 = arith.constant 0 : index
      %c0_63 = arith.constant 0 : index
      %73 = vector.load %arg19[%c0_62, %c0_63] : memref<8x4xf32, #tpu.memory_space<vmem>>, vector<8x4xf32>
      tpu.vector_store %arg19[%c0_62, %c0_63], %72 {strides = array<i32>} : memref<8x4xf32, #tpu.memory_space<vmem>>, vector<8x4xf32>,
    } else {
    }
    %c0 = arith.constant 0 : index
    %c0_1 = arith.constant 0 : index
    %c0_2 = arith.constant 0 : index
    %3 = vector.load %arg5[%c0, %c0_1, %c0_2] : memref<1x8x32xf32, #tpu.memory_space<vmem>>, vector<1x8x32xf32>
    %4 = vector.shape_cast %3 : vector<1x8x32xf32> to vector<8x32xf32>
    %c0_3 = arith.constant 0 : index
    %c0_4 = arith.constant 0 : index
    %c0_5 = arith.constant 0 : index
    %5 = vector.load %arg9[%c0_3, %c0_4, %c0_5] : memref<1x32x4xf32, #tpu.memory_space<vmem>>, vector<1x32x4xf32>
    %6 = vector.shape_cast %5 : vector<1x32x4xf32> to vector<32x4xf32>
    %cst = arith.constant dense<0.000000e+00> : vector<8x4xf32>
    %7 = tpu.matmul %4, %6, %cst {dimension_numbers = #tpu.dot_dimension_numbers<[1], [0], [0], [1], [0, 0, 1, 1], [], []>} : vector<8x32xf32>, vector<32x4xf32>, vector<8x4xf32> -> vector<8x4xf32>
    %c0_6 = arith.constant 0 : index
    %c0_7 = arith.constant 0 : index
    %c0_8 = arith.constant 0 : index
    %8 = vector.load %arg10[%c0_6, %c0_7, %c0_8] : memref<1x1x4xf32, #tpu.memory_space<vmem>>, vector<1x1x4xf32>
    %9 = vector.shape_cast %8 : vector<1x1x4xf32> to vector<1x4xf32>
    %10 = vector.broadcast %9 : vector<1x4xf32> to vector<8x4xf32>
    %11 = arith.addf %7, %10 : vector<8x4xf32>
    %c0_9 = arith.constant 0 : index
    %c0_10 = arith.constant 0 : index
    %c0_11 = arith.constant 0 : index
    %12 = vector.load %arg6[%c0_9, %c0_10, %c0_11] : memref<1x8x32xf32, #tpu.memory_space<vmem>>, vector<1x8x32xf32>
    %13 = vector.shape_cast %12 : vector<1x8x32xf32> to vector<8x32xf32>
    %c0_12 = arith.constant 0 : index
    %c0_13 = arith.constant 0 : index
    %c0_14 = arith.constant 0 : index
    %14 = vector.load %arg11[%c0_12, %c0_13, %c0_14] : memref<1x32x4xf32, #tpu.memory_space<vmem>>, vector<1x32x4xf32>
    %15 = vector.shape_cast %14 : vector<1x32x4xf32> to vector<32x4xf32>
    %cst_15 = arith.constant dense<0.000000e+00> : vector<8x4xf32>
    %16 = tpu.matmul %13, %15, %cst_15 {dimension_numbers = #tpu.dot_dimension_numbers<[1], [0], [0], [1], [0, 0, 1, 1], [], []>} : vector<8x32xf32>, vector<32x4xf32>, vector<8x4xf32> -> vector<8x4xf32>
    %c0_16 = arith.constant 0 : index
    %c0_17 = arith.constant 0 : index
    %c0_18 = arith.constant 0 : index
    %17 = vector.load %arg12[%c0_16, %c0_17, %c0_18] : memref<1x1x4xf32, #tpu.memory_space<vmem>>, vector<1x1x4xf32>
    %18 = vector.shape_cast %17 : vector<1x1x4xf32> to vector<1x4xf32>
    %19 = vector.broadcast %18 : vector<1x4xf32> to vector<8x4xf32>
    %20 = arith.addf %16, %19 : vector<8x4xf32>
    %c0_19 = arith.constant 0 : index
    %c0_20 = arith.constant 0 : index
    %21 = vector.load %arg16[%c0_19, %c0_20] : memref<8x4xf32, #tpu.memory_space<vmem>>, vector<8x4xf32>
    %cst_21 = arith.constant dense<0.000000e+00> : vector<8x8xf32>
    %22 = tpu.matmul %21, %11, %cst_21 {dimension_numbers = #tpu.dot_dimension_numbers<[1], [1], [0], [0], [0, 0, 1, 0], [], []>} : vector<8x4xf32>, vector<8x4xf32>, vector<8x8xf32> -> vector<8x8xf32>
    %c0_22 = arith.constant 0 : index
    %c0_23 = arith.constant 0 : index
    %23 = vector.load %arg17[%c0_22, %c0_23] : memref<8x1xf32, #tpu.memory_space<vmem>>, vector<8x1xf32>
    %cst_24 = arith.constant dense<0xFF800000> : vector<8xf32>
    %24 = vector.multi_reduction <maximumf>, %22, %cst_24 [1] : vector<8x8xf32> to vector<8xf32>
    %25 = vector.shape_cast %24 : vector<8xf32> to vector<8x1xf32>
    %26 = arith.maximumf %23, %25 : vector<8x1xf32>
    %27 = arith.subf %23, %26 : vector<8x1xf32>
    %28 = math.exp %27 : vector<8x1xf32>
    %29 = vector.broadcast %26 : vector<8x1xf32> to vector<8x8xf32>
    %30 = arith.subf %22, %29 : vector<8x8xf32>
    %31 = math.exp %30 : vector<8x8xf32>
    %c0_25 = arith.constant 0 : index
    %c0_26 = arith.constant 0 : index
    %32 = vector.load %arg18[%c0_25, %c0_26] : memref<8x1xf32, #tpu.memory_space<vmem>>, vector<8x1xf32>
    %33 = arith.mulf %28, %32 : vector<8x1xf32>
    %cst_27 = arith.constant dense<0.000000e+00> : vector<8xf32>
    %34 = vector.multi_reduction <add>, %31, %cst_27 [1] : vector<8x8xf32> to vector<8xf32>
    %35 = vector.shape_cast %34 : vector<8xf32> to vector<8x1xf32>
    %36 = arith.addf %33, %35 : vector<8x1xf32>
    %c0_28 = arith.constant 0 : index
    %c0_29 = arith.constant 0 : index
    %37 = vector.load %arg18[%c0_28, %c0_29] : memref<8x1xf32, #tpu.memory_space<vmem>>, vector<8x1xf32>
    tpu.vector_store %arg18[%c0_28, %c0_29], %36 {strides = array<i32>} : memref<8x1xf32, #tpu.memory_space<vmem>>, vector<8x1xf32>,
    %c0_30 = arith.constant 0 : index
    %c0_31 = arith.constant 0 : index
    %38 = vector.load %arg19[%c0_30, %c0_31] : memref<8x4xf32, #tpu.memory_space<vmem>>, vector<8x4xf32>
    %39 = vector.broadcast %28 : vector<8x1xf32> to vector<8x4xf32>
    %40 = arith.mulf %39, %38 : vector<8x4xf32>
    %cst_32 = arith.constant dense<0.000000e+00> : vector<8x4xf32>
    %41 = tpu.matmul %31, %20, %cst_32 {dimension_numbers = #tpu.dot_dimension_numbers<[1], [0], [0], [1], [0, 0, 1, 1], [], []>} : vector<8x8xf32>, vector<8x4xf32>, vector<8x4xf32> -> vector<8x4xf32>
    %42 = arith.addf %40, %41 : vector<8x4xf32>
    %c0_33 = arith.constant 0 : index
    %c0_34 = arith.constant 0 : index
    %43 = vector.load %arg19[%c0_33, %c0_34] : memref<8x4xf32, #tpu.memory_space<vmem>>, vector<8x4xf32>
    tpu.vector_store %arg19[%c0_33, %c0_34], %42 {strides = array<i32>} : memref<8x4xf32, #tpu.memory_space<vmem>>, vector<8x4xf32>,
    %c0_35 = arith.constant 0 : index
    %c0_36 = arith.constant 0 : index
    %44 = vector.load %arg17[%c0_35, %c0_36] : memref<8x1xf32, #tpu.memory_space<vmem>>, vector<8x1xf32>
    tpu.vector_store %arg17[%c0_35, %c0_36], %26 {strides = array<i32>} : memref<8x1xf32, #tpu.memory_space<vmem>>, vector<8x1xf32>,
    %c0_i32_37 = arith.constant 0 : i32
    %45 = arith.cmpi eq, %arg3, %c0_i32_37 : i32
    %c0_i32_38 = arith.constant 0 : i32
    %46 = arith.cmpi eq, %arg2, %c0_i32_38 : i32
    %47 = arith.andi %45, %46 : i1
    %48 = arith.extui %47 : i1 to i32
    %c0_i32_39 = arith.constant 0 : i32
    %49 = arith.cmpi ne, %48, %c0_i32_39 : i32
    scf.if %49 {
      %cst_42 = arith.constant 0.000000e+00 : f32
      %56 = vector.broadcast %cst_42 : f32 to vector<8x32xf32>
      %c0_43 = arith.constant 0 : index
      %c0_44 = arith.constant 0 : index
      %57 = vector.load %arg20[%c0_43, %c0_44] : memref<8x32xf32, #tpu.memory_space<vmem>>, vector<8x32xf32>
      tpu.vector_store %arg20[%c0_43, %c0_44], %56 {strides = array<i32>} : memref<8x32xf32, #tpu.memory_space<vmem>>, vector<8x32xf32>,
    } else {
    }
    %50 = arith.extui %45 : i1 to i32
    %c0_i32_40 = arith.constant 0 : i32
    %51 = arith.cmpi ne, %50, %c0_i32_40 : i32
    scf.if %51 {
      %c0_42 = arith.constant 0 : index
      %c0_43 = arith.constant 0 : index
      %56 = vector.load %arg18[%c0_42, %c0_43] : memref<8x1xf32, #tpu.memory_space<vmem>>, vector<8x1xf32>
      %57 = tpu.reciprocal %56 {approx = true} : vector<8x1xf32> -> vector<8x1xf32>
      %c0_44 = arith.constant 0 : index
      %c0_45 = arith.constant 0 : index
      %58 = vector.load %arg18[%c0_44, %c0_45] : memref<8x1xf32, #tpu.memory_space<vmem>>, vector<8x1xf32>
      %59 = arith.mulf %58, %57 : vector<8x1xf32>
      %cst_46 = arith.constant 2.000000e+00 : f32
      %60 = vector.broadcast %cst_46 : f32 to vector<8x1xf32>
      %61 = arith.subf %60, %59 : vector<8x1xf32>
      %62 = arith.mulf %57, %61 : vector<8x1xf32>
      %c0_47 = arith.constant 0 : index
      %c0_48 = arith.constant 0 : index
      %63 = vector.load %arg19[%c0_47, %c0_48] : memref<8x4xf32, #tpu.memory_space<vmem>>, vector<8x4xf32>
      %64 = vector.broadcast %62 : vector<8x1xf32> to vector<8x4xf32>
      %65 = arith.mulf %63, %64 : vector<8x4xf32>
      %c0_49 = arith.constant 0 : index
      %c0_50 = arith.constant 0 : index
      %66 = vector.load %arg20[%c0_49, %c0_50] : memref<8x32xf32, #tpu.memory_space<vmem>>, vector<8x32xf32>
      %c0_51 = arith.constant 0 : index
      %c0_52 = arith.constant 0 : index
      %c0_53 = arith.constant 0 : index
      %67 = vector.load %arg13[%c0_51, %c0_52, %c0_53] : memref<1x4x32xf32, #tpu.memory_space<vmem>>, vector<1x4x32xf32>
      %68 = vector.shape_cast %67 : vector<1x4x32xf32> to vector<4x32xf32>
      %cst_54 = arith.constant dense<0.000000e+00> : vector<8x32xf32>
      %69 = tpu.matmul %65, %68, %cst_54 {dimension_numbers = #tpu.dot_dimension_numbers<[1], [0], [0], [1], [0, 0, 1, 1], [], []>} : vector<8x4xf32>, vector<4x32xf32>, vector<8x32xf32> -> vector<8x32xf32>
      %70 = arith.addf %66, %69 : vector<8x32xf32>
      %c0_55 = arith.constant 0 : index
      %c0_56 = arith.constant 0 : index
      %71 = vector.load %arg20[%c0_55, %c0_56] : memref<8x32xf32, #tpu.memory_space<vmem>>, vector<8x32xf32>
      tpu.vector_store %arg20[%c0_55, %c0_56], %70 {strides = array<i32>} : memref<8x32xf32, #tpu.memory_space<vmem>>, vector<8x32xf32>,
    } else {
    }
    %c7_i32 = arith.constant 7 : i32
    %52 = arith.cmpi eq, %arg2, %c7_i32 : i32
    %53 = arith.andi %45, %52 : i1
    %54 = arith.extui %53 : i1 to i32
    %c0_i32_41 = arith.constant 0 : i32
    %55 = arith.cmpi ne, %54, %c0_i32_41 : i32
    scf.if %55 {
      %c0_42 = arith.constant 0 : index
      %c0_43 = arith.constant 0 : index
      %56 = vector.load %arg20[%c0_42, %c0_43] : memref<8x32xf32, #tpu.memory_space<vmem>>, vector<8x32xf32>
      %c0_44 = arith.constant 0 : index
      %c0_45 = arith.constant 0 : index
      %57 = vector.load %arg14[%c0_44, %c0_45] : memref<1x32xf32, #tpu.memory_space<vmem>>, vector<1x32xf32>
      %58 = vector.broadcast %57 : vector<1x32xf32> to vector<8x32xf32>
      %59 = arith.addf %56, %58 : vector<8x32xf32>
      %c0_46 = arith.constant 0 : index
      %c0_47 = arith.constant 0 : index
      %c0_48 = arith.constant 0 : index
      %60 = vector.load %arg15[%c0_46, %c0_47, %c0_48] : memref<1x8x32xf32, #tpu.memory_space<vmem>>, vector<1x8x32xf32>
      %61 = vector.shape_cast %60 : vector<1x8x32xf32> to vector<8x32xf32>
      %62 = vector.shape_cast %59 : vector<8x32xf32> to vector<1x8x32xf32>
      tpu.vector_store %arg15[%c0_46, %c0_47, %c0_48], %62 {strides = array<i32>} : memref<1x8x32xf32, #tpu.memory_space<vmem>>, vector<1x8x32xf32>,
    } else {
    }
    return
  }
  func.func @transform_0(%arg0: i32, %arg1: i32, %arg2: i32, %arg3: i32) -> (i32, i32, i32) {
    %c0_i32 = arith.constant 0 : i32
    %c0_i32_0 = arith.constant 0 : i32
    return %arg0, %arg1, %c0_i32 : i32, i32, i32
  }
  func.func @transform_1(%arg0: i32, %arg1: i32, %arg2: i32, %arg3: i32) -> (i32, i32, i32) {
    %c0_i32 = arith.constant 0 : i32
    %c0_i32_0 = arith.constant 0 : i32
    return %arg0, %arg3, %c0_i32 : i32, i32, i32
  }
  func.func @transform_2(%arg0: i32, %arg1: i32, %arg2: i32, %arg3: i32) -> (i32, i32, i32) {
    %c0_i32 = arith.constant 0 : i32
    %c0_i32_0 = arith.constant 0 : i32
    return %arg0, %arg3, %c0_i32 : i32, i32, i32
  }
  func.func @transform_3(%arg0: i32, %arg1: i32, %arg2: i32, %arg3: i32) -> (i32, i32, i32) {
    %c0_i32 = arith.constant 0 : i32
    %c0_i32_0 = arith.constant 0 : i32
    %c0_i32_1 = arith.constant 0 : i32
    return %arg2, %c0_i32, %c0_i32_0 : i32, i32, i32
  }
  func.func @transform_4(%arg0: i32, %arg1: i32, %arg2: i32, %arg3: i32) -> (i32, i32, i32) {
    %c0_i32 = arith.constant 0 : i32
    %c0_i32_0 = arith.constant 0 : i32
    %c0_i32_1 = arith.constant 0 : i32
    return %arg2, %c0_i32, %c0_i32_0 : i32, i32, i32
  }
  func.func @transform_5(%arg0: i32, %arg1: i32, %arg2: i32, %arg3: i32) -> (i32, i32, i32) {
    %c0_i32 = arith.constant 0 : i32
    %c0_i32_0 = arith.constant 0 : i32
    %c0_i32_1 = arith.constant 0 : i32
    return %arg2, %c0_i32, %c0_i32_0 : i32, i32, i32
  }
  func.func @transform_6(%arg0: i32, %arg1: i32, %arg2: i32, %arg3: i32) -> (i32, i32, i32) {
    %c0_i32 = arith.constant 0 : i32
    %c0_i32_0 = arith.constant 0 : i32
    %c0_i32_1 = arith.constant 0 : i32
    return %arg2, %c0_i32, %c0_i32_0 : i32, i32, i32
  }
  func.func @transform_7(%arg0: i32, %arg1: i32, %arg2: i32, %arg3: i32) -> (i32, i32, i32) {
    %c0_i32 = arith.constant 0 : i32
    %c0_i32_0 = arith.constant 0 : i32
    %c0_i32_1 = arith.constant 0 : i32
    return %arg2, %c0_i32, %c0_i32_0 : i32, i32, i32
  }
  func.func @transform_8(%arg0: i32, %arg1: i32, %arg2: i32, %arg3: i32) -> (i32, i32, i32) {
    %c0_i32 = arith.constant 0 : i32
    %c0_i32_0 = arith.constant 0 : i32
    %c0_i32_1 = arith.constant 0 : i32
    return %arg2, %c0_i32, %c0_i32_0 : i32, i32, i32
  }
  func.func @transform_9(%arg0: i32, %arg1: i32, %arg2: i32, %arg3: i32) -> (i32, i32, i32) {
    %c0_i32 = arith.constant 0 : i32
    %c0_i32_0 = arith.constant 0 : i32
    %c0_i32_1 = arith.constant 0 : i32
    return %arg2, %c0_i32, %c0_i32_0 : i32, i32, i32
  }
  func.func @transform_10(%arg0: i32, %arg1: i32, %arg2: i32, %arg3: i32) -> (i32, i32) {
    %c0_i32 = arith.constant 0 : i32
    %c0_i32_0 = arith.constant 0 : i32
    %c0_i32_1 = arith.constant 0 : i32
    return %c0_i32, %c0_i32_0 : i32, i32
  }
  func.func @transform_11(%arg0: i32, %arg1: i32, %arg2: i32, %arg3: i32) -> (i32, i32, i32) {
    %c0_i32 = arith.constant 0 : i32
    %c0_i32_0 = arith.constant 0 : i32
    return %arg0, %arg1, %c0_i32 : i32, i32, i32
  }
}

</mosaic_0001>

<llo_original>
// kernel: tpu_custom_call.1
$region0: #{tpu_custom_call.1}
  #allocation0 [shape = 'u32[]', space=smem, size = 0x4, offset = 0x4, fixed_abs, tag = 'smem constant byte address 0x4 - core index']
  #allocation1 [shape = 'u32[72,128]{1,0:T(1,128)}', space=vmem, size = 0x9000, scoped, tag = 'internal scratch']
  #allocation2 [shape = 'f32[8,4]{1,0:T(8,128)}', space=vmem, size = 0x1000, scoped, tag = 'scratch operand']
  #allocation3 [shape = 'f32[8,1]{1,0:T(8,128)}', space=vmem, size = 0x1000, scoped, tag = 'scratch operand']
  #allocation4 [shape = 'f32[8,1]{1,0:T(8,128)}', space=vmem, size = 0x1000, scoped, tag = 'scratch operand']
  #allocation5 [shape = 'f32[8,4]{1,0:T(8,128)}', space=vmem, size = 0x1000, scoped, tag = 'scratch operand']
  #allocation6 [shape = 'f32[8,32]{1,0:T(8,128)}', space=vmem, size = 0x1000, scoped, tag = 'scratch operand']
  %s0 = inlined_call_operand.vmem [shape: f32[2,8,32], index: 0, kind: input, shape index: {}]
  %s1 = inlined_call_operand.vmem [shape: f32[2,8,32], index: 1, kind: input, shape index: {}]
  %s2 = inlined_call_operand.vmem [shape: f32[2,8,32], index: 2, kind: input, shape index: {}]
  %s3 = inlined_call_operand.vmem [shape: f32[8,32,4], index: 3, kind: input, shape index: {}]
  %s4 = inlined_call_operand.vmem [shape: f32[8,1,4], index: 4, kind: input, shape index: {}]
  %s5 = inlined_call_operand.vmem [shape: f32[8,32,4], index: 5, kind: input, shape index: {}]
  %s6 = inlined_call_operand.vmem [shape: f32[8,1,4], index: 6, kind: input, shape index: {}]
  %s7 = inlined_call_operand.vmem [shape: f32[8,32,4], index: 7, kind: input, shape index: {}]
  %s8 = inlined_call_operand.vmem [shape: f32[8,1,4], index: 8, kind: input, shape index: {}]
  %s9 = inlined_call_operand.vmem [shape: f32[8,4,32], index: 9, kind: input, shape index: {}]
  %s10 = inlined_call_operand.vmem [shape: f32[1,32], index: 10, kind: input, shape index: {}]
  %s11 = inlined_call_operand.hbm [shape: f32[2,8,32], index: 11, kind: output, shape index: {}]
  %s12 = sld [smem:[#allocation0]]
  $region93: #{tpu_custom_call.1} parent=0
    _
  %s14 = ssub.s32 1, %s12
  %s15 = scalar_select 0, %s14, %s12
  $region1: #{tpu_custom_call.1} parent=0
    #allocation7 [shape = 'u8[8192]{0}', space=vmem, size = 0x2000, scoped, tag = 'output window, operand 0']
    #allocation8 [shape = 's32[2]{0}', space=sflag, size = 0x8, scoped, tag = 'scoped memory for tpu_custom_call.1']
    %16 = vsyncpa [#allocation8], 0
    %s17 = scalar_lea.sflag [#allocation8], 1
    %18 = vsyncpa %s17, 0
    loop: start=0, step=1, limit=18
    $region2: #{tpu_custom_call.1} parent=1 // loop_pre_header
      _
    $region3: #{tpu_custom_call.1} parent=1 // loop_header
      %s20 = sphi 0, %s24
      %p21 = scmp.ge.s32.totalorder %s20, 18
      %s27 = sphi 0, %s53
      %s28 = sphi 0, %s49
      %s29 = sphi 0, %s45
      %s30 = sphi 0, %s41
      %s31 = sphi 0, %s27
      %s32 = sphi 0, %s28
      %s33 = sphi 0, %s29
      %s34 = sphi 0, %s30
      %s35 = sphi 0, %s31
      %s36 = sphi 0, %s32
      %s37 = sphi 0, %s33
      %s38 = sphi 0, %s34
      %s58 = sphi 0, %s60
      %s61 = sphi 0, %s58
      %s62 = sphi 0, %s61
      %s78 = sphi 0, %s62
      %s86 = sphi 0, %s88
      %s89 = sphi 0, %s86
      %s90 = sphi 0, %s89
      %s106 = sphi 0, %s90
      %s114 = sphi 0, %s116
      %s117 = sphi 0, %s114
      %s118 = sphi 0, %s117
      %s134 = sphi 0, %s118
      %s140 = sphi 0, %s142
      %s143 = sphi 0, %s140
      %s144 = sphi 0, %s143
      %s160 = sphi 0, %s144
      %s166 = sphi 0, %s168
      %s169 = sphi 0, %s166
      %s170 = sphi 0, %s169
      %s186 = sphi 0, %s170
      %s192 = sphi 0, %s194
      %s195 = sphi 0, %s192
      %s196 = sphi 0, %s195
      %s212 = sphi 0, %s196
      %s218 = sphi 0, %s220
      %s221 = sphi 0, %s218
      %s222 = sphi 0, %s221
      %s238 = sphi 0, %s222
      %s244 = sphi 0, %s246
      %s247 = sphi 0, %s244
      %s248 = sphi 0, %s247
      %s264 = sphi 0, %s248
      %s270 = sphi 0, %s272
      %s273 = sphi 0, %s270
      %s274 = sphi 0, %s273
      %s290 = sphi 0, %s274
      %s296 = sphi 0, %s298
      %s299 = sphi 0, %s296
      %s300 = sphi 0, %s299
      %s316 = sphi 0, %s300
      %s320 = sphi 0, %s320
      %s322 = sphi 0, %s320
      %s323 = sphi 0, %s322
      %s337 = sphi 0, %s323
      %s345 = sphi 0, %s347
      %s348 = sphi 0, %s345
      %s349 = sphi 0, %s348
      %s365 = sphi 0, %s349
    $region4: #{tpu_custom_call.1} parent=1 // loop_header_branch
      %23 = sbr.rel (%p21) target = $region8
    $region5: #{tpu_custom_call.1} parent=1 // loop_body
      %s25 = ssub.s32 %s20, 1
      %s26 = ssub.s32 %s20, 2
      %s39 = sadd.s32 1, %s30
      %p40 = scmp.ge.s32.totalorder %s39, 1
      %s41 = scalar_select %p40, 0, %s39
      %s42 = sadd.s32 1, %s29
      %s43 = scalar_select %p40, %s42, %s29
      %p44 = scmp.ge.s32.totalorder %s43, 8
      %s45 = scalar_select %p44, 0, %s43
      %s46 = sadd.s32 1, %s28
      %s47 = scalar_select %p44, %s46, %s28
      %p48 = scmp.ge.s32.totalorder %s47, 1
      %s49 = scalar_select %p48, 0, %s47
      %s50 = sadd.s32 1, %s27
      %s51 = scalar_select %p48, %s50, %s27
      %p52 = scmp.ge.s32.totalorder %s51, 2
      %s53 = scalar_select %p52, 0, %s51
      %s54 = ssub.s32 %s27, %s53
      %s55 = ssub.s32 %s28, %s49
      %s56 = sor.u32 %s54, %s55
      %p57 = scmp.eq.s32.totalorder %s56, 0
      %s59 = sadd.s32 %s58, 1
      %s60 = scalar_select %p57, %s58, %s59
      %p63 = pneg %p57
      %p64 = scmp.eq.s32.totalorder %s20, 15
      %p65 = por %p63, %p64
      %p66 = scmp.ne.s32.totalorder %s58, %s61
      %p67 = scmp.eq.s32.totalorder %s20, 0
      %p68 = por %p66, %p67
      %p69 = scmp.ne.s32.totalorder %s58, %s61
      %p70 = scmp.eq.s32.totalorder %s25, 15
      %p71 = por %p69, %p70
      %p72 = scmp.ne.s32.totalorder %s61, %s62
      %p73 = scmp.eq.s32.totalorder %s25, 0
      %p74 = por %p72, %p73
      %p75 = scmp.ne.s32.totalorder %s61, %s62
      %p76 = scmp.eq.s32.totalorder %s26, 15
      %p77 = por %p75, %p76
      %p79 = scmp.ne.s32.totalorder %s62, %s78
      %p80 = scmp.eq.s32.totalorder %s26, 0
      %p81 = por %p79, %p80
      %s82 = ssub.s32 %s27, %s53
      %s83 = ssub.s32 %s30, %s41
      %s84 = sor.u32 %s82, %s83
      %p85 = scmp.eq.s32.totalorder %s84, 0
      %s87 = sadd.s32 %s86, 1
      %s88 = scalar_select %p85, %s86, %s87
      %p91 = pneg %p85
      %p92 = scmp.eq.s32.totalorder %s20, 15
      %p93 = por %p91, %p92
      %p94 = scmp.ne.s32.totalorder %s86, %s89
      %p95 = scmp.eq.s32.totalorder %s20, 0
      %p96 = por %p94, %p95
      %p97 = scmp.ne.s32.totalorder %s86, %s89
      %p98 = scmp.eq.s32.totalorder %s25, 15
      %p99 = por %p97, %p98
      %p100 = scmp.ne.s32.totalorder %s89, %s90
      %p101 = scmp.eq.s32.totalorder %s25, 0
      %p102 = por %p100, %p101
      %p103 = scmp.ne.s32.totalorder %s89, %s90
      %p104 = scmp.eq.s32.totalorder %s26, 15
      %p105 = por %p103, %p104
      %p107 = scmp.ne.s32.totalorder %s90, %s106
      %p108 = scmp.eq.s32.totalorder %s26, 0
      %p109 = por %p107, %p108
      %s110 = ssub.s32 %s27, %s53
      %s111 = ssub.s32 %s30, %s41
      %s112 = sor.u32 %s110, %s111
      %p113 = scmp.eq.s32.totalorder %s112, 0
      %s115 = sadd.s32 %s114, 1
      %s116 = scalar_select %p113, %s114, %s115
      %p119 = pneg %p113
      %p120 = scmp.eq.s32.totalorder %s20, 15
      %p121 = por %p119, %p120
      %p122 = scmp.ne.s32.totalorder %s114, %s117
      %p123 = scmp.eq.s32.totalorder %s20, 0
      %p124 = por %p122, %p123
      %p125 = scmp.ne.s32.totalorder %s114, %s117
      %p126 = scmp.eq.s32.totalorder %s25, 15
      %p127 = por %p125, %p126
      %p128 = scmp.ne.s32.totalorder %s117, %s118
      %p129 = scmp.eq.s32.totalorder %s25, 0
      %p130 = por %p128, %p129
      %p131 = scmp.ne.s32.totalorder %s117, %s118
      %p132 = scmp.eq.s32.totalorder %s26, 15
      %p133 = por %p131, %p132
      %p135 = scmp.ne.s32.totalorder %s118, %s134
      %p136 = scmp.eq.s32.totalorder %s26, 0
      %p137 = por %p135, %p136
      %s138 = ssub.s32 %s29, %s45
      %p139 = scmp.eq.s32.totalorder %s138, 0
      %s141 = sadd.s32 %s140, 1
      %s142 = scalar_select %p139, %s140, %s141
      %p145 = pneg %p139
      %p146 = scmp.eq.s32.totalorder %s20, 15
      %p147 = por %p145, %p146
      %p148 = scmp.ne.s32.totalorder %s140, %s143
      %p149 = scmp.eq.s32.totalorder %s20, 0
      %p150 = por %p148, %p149
      %p151 = scmp.ne.s32.totalorder %s140, %s143
      %p152 = scmp.eq.s32.totalorder %s25, 15
      %p153 = por %p151, %p152
      %p154 = scmp.ne.s32.totalorder %s143, %s144
      %p155 = scmp.eq.s32.totalorder %s25, 0
      %p156 = por %p154, %p155
      %p157 = scmp.ne.s32.totalorder %s143, %s144
      %p158 = scmp.eq.s32.totalorder %s26, 15
      %p159 = por %p157, %p158
      %p161 = scmp.ne.s32.totalorder %s144, %s160
      %p162 = scmp.eq.s32.totalorder %s26, 0
      %p163 = por %p161, %p162
      %s164 = ssub.s32 %s29, %s45
      %p165 = scmp.eq.s32.totalorder %s164, 0
      %s167 = sadd.s32 %s166, 1
      %s168 = scalar_select %p165, %s166, %s167
      %p171 = pneg %p165
      %p172 = scmp.eq.s32.totalorder %s20, 15
      %p173 = por %p171, %p172
      %p174 = scmp.ne.s32.totalorder %s166, %s169
      %p175 = scmp.eq.s32.totalorder %s20, 0
      %p176 = por %p174, %p175
      %p177 = scmp.ne.s32.totalorder %s166, %s169
      %p178 = scmp.eq.s32.totalorder %s25, 15
      %p179 = por %p177, %p178
      %p180 = scmp.ne.s32.totalorder %s169, %s170
      %p181 = scmp.eq.s32.totalorder %s25, 0
      %p182 = por %p180, %p181
      %p183 = scmp.ne.s32.totalorder %s169, %s170
      %p184 = scmp.eq.s32.totalorder %s26, 15
      %p185 = por %p183, %p184
      %p187 = scmp.ne.s32.totalorder %s170, %s186
      %p188 = scmp.eq.s32.totalorder %s26, 0
      %p189 = por %p187, %p188
      %s190 = ssub.s32 %s29, %s45
      %p191 = scmp.eq.s32.totalorder %s190, 0
      %s193 = sadd.s32 %s192, 1
      %s194 = scalar_select %p191, %s192, %s193
      %p197 = pneg %p191
      %p198 = scmp.eq.s32.totalorder %s20, 15
      %p199 = por %p197, %p198
      %p200 = scmp.ne.s32.totalorder %s192, %s195
      %p201 = scmp.eq.s32.totalorder %s20, 0
      %p202 = por %p200, %p201
      %p203 = scmp.ne.s32.totalorder %s192, %s195
      %p204 = scmp.eq.s32.totalorder %s25, 15
      %p205 = por %p203, %p204
      %p206 = scmp.ne.s32.totalorder %s195, %s196
      %p207 = scmp.eq.s32.totalorder %s25, 0
      %p208 = por %p206, %p207
      %p209 = scmp.ne.s32.totalorder %s195, %s196
      %p210 = scmp.eq.s32.totalorder %s26, 15
      %p211 = por %p209, %p210
      %p213 = scmp.ne.s32.totalorder %s196, %s212
      %p214 = scmp.eq.s32.totalorder %s26, 0
      %p215 = por %p213, %p214
      %s216 = ssub.s32 %s29, %s45
      %p217 = scmp.eq.s32.totalorder %s216, 0
      %s219 = sadd.s32 %s218, 1
      %s220 = scalar_select %p217, %s218, %s219
      %p223 = pneg %p217
      %p224 = scmp.eq.s32.totalorder %s20, 15
      %p225 = por %p223, %p224
      %p226 = scmp.ne.s32.totalorder %s218, %s221
      %p227 = scmp.eq.s32.totalorder %s20, 0
      %p228 = por %p226, %p227
      %p229 = scmp.ne.s32.totalorder %s218, %s221
      %p230 = scmp.eq.s32.totalorder %s25, 15
      %p231 = por %p229, %p230
      %p232 = scmp.ne.s32.totalorder %s221, %s222
      %p233 = scmp.eq.s32.totalorder %s25, 0
      %p234 = por %p232, %p233
      %p235 = scmp.ne.s32.totalorder %s221, %s222
      %p236 = scmp.eq.s32.totalorder %s26, 15
      %p237 = por %p235, %p236
      %p239 = scmp.ne.s32.totalorder %s222, %s238
      %p240 = scmp.eq.s32.totalorder %s26, 0
      %p241 = por %p239, %p240
      %s242 = ssub.s32 %s29, %s45
      %p243 = scmp.eq.s32.totalorder %s242, 0
      %s245 = sadd.s32 %s244, 1
      %s246 = scalar_select %p243, %s244, %s245
      %p249 = pneg %p243
      %p250 = scmp.eq.s32.totalorder %s20, 15
      %p251 = por %p249, %p250
      %p252 = scmp.ne.s32.totalorder %s244, %s247
      %p253 = scmp.eq.s32.totalorder %s20, 0
      %p254 = por %p252, %p253
      %p255 = scmp.ne.s32.totalorder %s244, %s247
      %p256 = scmp.eq.s32.totalorder %s25, 15
      %p257 = por %p255, %p256
      %p258 = scmp.ne.s32.totalorder %s247, %s248
      %p259 = scmp.eq.s32.totalorder %s25, 0
      %p260 = por %p258, %p259
      %p261 = scmp.ne.s32.totalorder %s247, %s248
      %p262 = scmp.eq.s32.totalorder %s26, 15
      %p263 = por %p261, %p262
      %p265 = scmp.ne.s32.totalorder %s248, %s264
      %p266 = scmp.eq.s32.totalorder %s26, 0
      %p267 = por %p265, %p266
      %s268 = ssub.s32 %s29, %s45
      %p269 = scmp.eq.s32.totalorder %s268, 0
      %s271 = sadd.s32 %s270, 1
      %s272 = scalar_select %p269, %s270, %s271
      %p275 = pneg %p269
      %p276 = scmp.eq.s32.totalorder %s20, 15
      %p277 = por %p275, %p276
      %p278 = scmp.ne.s32.totalorder %s270, %s273
      %p279 = scmp.eq.s32.totalorder %s20, 0
      %p280 = por %p278, %p279
      %p281 = scmp.ne.s32.totalorder %s270, %s273
      %p282 = scmp.eq.s32.totalorder %s25, 15
      %p283 = por %p281, %p282
      %p284 = scmp.ne.s32.totalorder %s273, %s274
      %p285 = scmp.eq.s32.totalorder %s25, 0
      %p286 = por %p284, %p285
      %p287 = scmp.ne.s32.totalorder %s273, %s274
      %p288 = scmp.eq.s32.totalorder %s26, 15
      %p289 = por %p287, %p288
      %p291 = scmp.ne.s32.totalorder %s274, %s290
      %p292 = scmp.eq.s32.totalorder %s26, 0
      %p293 = por %p291, %p292
      %s294 = ssub.s32 %s29, %s45
      %p295 = scmp.eq.s32.totalorder %s294, 0
      %s297 = sadd.s32 %s296, 1
      %s298 = scalar_select %p295, %s296, %s297
      %p301 = pneg %p295
      %p302 = scmp.eq.s32.totalorder %s20, 15
      %p303 = por %p301, %p302
      %p304 = scmp.ne.s32.totalorder %s296, %s299
      %p305 = scmp.eq.s32.totalorder %s20, 0
      %p306 = por %p304, %p305
      %p307 = scmp.ne.s32.totalorder %s296, %s299
      %p308 = scmp.eq.s32.totalorder %s25, 15
      %p309 = por %p307, %p308
      %p310 = scmp.ne.s32.totalorder %s299, %s300
      %p311 = scmp.eq.s32.totalorder %s25, 0
      %p312 = por %p310, %p311
      %p313 = scmp.ne.s32.totalorder %s299, %s300
      %p314 = scmp.eq.s32.totalorder %s26, 15
      %p315 = por %p313, %p314
      %p317 = scmp.ne.s32.totalorder %s300, %s316
      %p318 = scmp.eq.s32.totalorder %s26, 0
      %p319 = por %p317, %p318
      %s321 = sadd.s32 %s320, 1
      %p324 = scmp.eq.s32.totalorder %s20, 15
      %p325 = scmp.ne.s32.totalorder %s320, %s322
      %p326 = scmp.eq.s32.totalorder %s20, 0
      %p327 = por %p325, %p326
      %p328 = scmp.ne.s32.totalorder %s320, %s322
      %p329 = scmp.eq.s32.totalorder %s25, 15
      %p330 = por %p328, %p329
      %p331 = scmp.ne.s32.totalorder %s322, %s323
      %p332 = scmp.eq.s32.totalorder %s25, 0
      %p333 = por %p331, %p332
      %p334 = scmp.ne.s32.totalorder %s322, %s323
      %p335 = scmp.eq.s32.totalorder %s26, 15
      %p336 = por %p334, %p335
      %p338 = scmp.ne.s32.totalorder %s323, %s337
      %p339 = scmp.eq.s32.totalorder %s26, 0
      %p340 = por %p338, %p339
      %s341 = ssub.s32 %s27, %s53
      %s342 = ssub.s32 %s28, %s49
      %s343 = sor.u32 %s341, %s342
      %p344 = scmp.eq.s32.totalorder %s343, 0
      %s346 = sadd.s32 %s345, 1
      %s347 = scalar_select %p344, %s345, %s346
      %p350 = pneg %p344
      %p351 = scmp.eq.s32.totalorder %s20, 15
      %p352 = por %p350, %p351
      %p353 = scmp.ne.s32.totalorder %s345, %s348
      %p354 = scmp.eq.s32.totalorder %s20, 0
      %p355 = por %p353, %p354
      %p356 = scmp.ne.s32.totalorder %s345, %s348
      %p357 = scmp.eq.s32.totalorder %s25, 15
      %p358 = por %p356, %p357
      %p359 = scmp.ne.s32.totalorder %s348, %s349
      %p360 = scmp.eq.s32.totalorder %s25, 0
      %p361 = por %p359, %p360
      %p362 = scmp.ne.s32.totalorder %s348, %s349
      %p363 = scmp.eq.s32.totalorder %s26, 15
      %p364 = por %p362, %p363
      %p366 = scmp.ne.s32.totalorder %s349, %s365
      %p367 = scmp.eq.s32.totalorder %s26, 0
      %p368 = por %p366, %p367
      %p369 = scmp.le.s32.totalorder 1, %s20
      %p370 = scmp.lt.s32.totalorder %s20, 17
      %p371 = pnand %p369, %p370
      %p372 = pneg %p371
      // Predicated region
      $region9: #{tpu_custom_call.1} parent=5 // pred_check
        _
      $region10: #{tpu_custom_call.1} parent=5 // pred_check_branch
        %374 = sbr.rel (%p371) target = $region12
      $region11: #{tpu_custom_call.1} parent=5 // pred_region
        %s375 = ssub.s32 %s20, 1
        // Predicated region
        $region13: #{tpu_custom_call.1} parent=11 // pred_check
          %p376 = pneg %p333
        $region14: #{tpu_custom_call.1} parent=11 // pred_check_branch
          %378 = sbr.rel (%p376) target = $region16
        $region15: #{tpu_custom_call.1} parent=11 // pred_region
          _
        $region16: #{tpu_custom_call.1} parent=11 // pred_fallthru
          _
      $region12: #{tpu_custom_call.1} parent=5 // pred_fallthru
        _
      %p379 = scmp.lt.s32.totalorder %s20, 16
      // Predicated region
      $region17: #{tpu_custom_call.1} parent=5 // pred_check
        %p380 = pneg %p379
      $region18: #{tpu_custom_call.1} parent=5 // pred_check_branch
        %382 = sbr.rel (%p380) target = $region20
      $region19: #{tpu_custom_call.1} parent=5 // pred_region
        // Predicated region
        $region21: #{tpu_custom_call.1} parent=19 // pred_check
          %p383 = pneg %p68
        $region22: #{tpu_custom_call.1} parent=19 // pred_check_branch
          %385 = sbr.rel (%p383) target = $region24
        $region23: #{tpu_custom_call.1} parent=19 // pred_region
          %p386 = scmp.lt.s32.totalorder %s27, 1
          %s387 = scalar_select %p386, %s27, 1
          %p388 = scmp.lt.s32.totalorder %s28, 0
          %s389 = scalar_select %p388, %s28, 0
          %s390 = sadd.s32 %s389, %s387
          %s391 = smul.addr %s390, 8
          %s392 = scalar_lea.vmem %s0, %s391
        $region24: #{tpu_custom_call.1} parent=19 // pred_fallthru
          _
        // Predicated region
        $region25: #{tpu_custom_call.1} parent=19 // pred_check
          %p393 = pneg %p96
        $region26: #{tpu_custom_call.1} parent=19 // pred_check_branch
          %395 = sbr.rel (%p393) target = $region28
        $region27: #{tpu_custom_call.1} parent=19 // pred_region
          %p396 = scmp.lt.s32.totalorder %s27, 1
          %s397 = scalar_select %p396, %s27, 1
          %p398 = scmp.lt.s32.totalorder %s30, 0
          %s399 = scalar_select %p398, %s30, 0
          %s400 = sadd.s32 %s399, %s397
          %s401 = smul.addr %s400, 8
          %s402 = scalar_lea.vmem %s1, %s401
        $region28: #{tpu_custom_call.1} parent=19 // pred_fallthru
          _
        // Predicated region
        $region29: #{tpu_custom_call.1} parent=19 // pred_check
          %p403 = pneg %p124
        $region30: #{tpu_custom_call.1} parent=19 // pred_check_branch
          %405 = sbr.rel (%p403) target = $region32
        $region31: #{tpu_custom_call.1} parent=19 // pred_region
          %p406 = scmp.lt.s32.totalorder %s27, 1
          %s407 = scalar_select %p406, %s27, 1
          %p408 = scmp.lt.s32.totalorder %s30, 0
          %s409 = scalar_select %p408, %s30, 0
          %s410 = sadd.s32 %s409, %s407
          %s411 = smul.addr %s410, 8
          %s412 = scalar_lea.vmem %s2, %s411
        $region32: #{tpu_custom_call.1} parent=19 // pred_fallthru
          _
        // Predicated region
        $region33: #{tpu_custom_call.1} parent=19 // pred_check
          %p413 = pneg %p150
        $region34: #{tpu_custom_call.1} parent=19 // pred_check_branch
          %415 = sbr.rel (%p413) target = $region36
        $region35: #{tpu_custom_call.1} parent=19 // pred_region
          %p416 = scmp.lt.s32.totalorder %s29, 7
          %s417 = scalar_select %p416, %s29, 7
          %s418 = smul.addr %s417, 4
          %s419 = smul.addr %s418, 8
          %s420 = scalar_lea.vmem %s3, %s419
        $region36: #{tpu_custom_call.1} parent=19 // pred_fallthru
          _
        // Predicated region
        $region37: #{tpu_custom_call.1} parent=19 // pred_check
          %p421 = pneg %p176
        $region38: #{tpu_custom_call.1} parent=19 // pred_check_branch
          %423 = sbr.rel (%p421) target = $region40
        $region39: #{tpu_custom_call.1} parent=19 // pred_region
          %p424 = scmp.lt.s32.totalorder %s29, 7
          %s425 = scalar_select %p424, %s29, 7
          %s426 = scalar_lea.vmem %s4, %s425
        $region40: #{tpu_custom_call.1} parent=19 // pred_fallthru
          _
        // Predicated region
        $region41: #{tpu_custom_call.1} parent=19 // pred_check
          %p427 = pneg %p202
        $region42: #{tpu_custom_call.1} parent=19 // pred_check_branch
          %429 = sbr.rel (%p427) target = $region44
        $region43: #{tpu_custom_call.1} parent=19 // pred_region
          %p430 = scmp.lt.s32.totalorder %s29, 7
          %s431 = scalar_select %p430, %s29, 7
          %s432 = smul.addr %s431, 4
          %s433 = smul.addr %s432, 8
          %s434 = scalar_lea.vmem %s5, %s433
        $region44: #{tpu_custom_call.1} parent=19 // pred_fallthru
          _
        // Predicated region
        $region45: #{tpu_custom_call.1} parent=19 // pred_check
          %p435 = pneg %p228
        $region46: #{tpu_custom_call.1} parent=19 // pred_check_branch
          %437 = sbr.rel (%p435) target = $region48
        $region47: #{tpu_custom_call.1} parent=19 // pred_region
          %p438 = scmp.lt.s32.totalorder %s29, 7
          %s439 = scalar_select %p438, %s29, 7
          %s440 = scalar_lea.vmem %s6, %s439
        $region48: #{tpu_custom_call.1} parent=19 // pred_fallthru
          _
        // Predicated region
        $region49: #{tpu_custom_call.1} parent=19 // pred_check
          %p441 = pneg %p254
        $region50: #{tpu_custom_call.1} parent=19 // pred_check_branch
          %443 = sbr.rel (%p441) target = $region52
        $region51: #{tpu_custom_call.1} parent=19 // pred_region
          %p444 = scmp.lt.s32.totalorder %s29, 7
          %s445 = scalar_select %p444, %s29, 7
          %s446 = smul.addr %s445, 4
          %s447 = smul.addr %s446, 8
          %s448 = scalar_lea.vmem %s7, %s447
        $region52: #{tpu_custom_call.1} parent=19 // pred_fallthru
          _
        // Predicated region
        $region53: #{tpu_custom_call.1} parent=19 // pred_check
          %p449 = pneg %p280
        $region54: #{tpu_custom_call.1} parent=19 // pred_check_branch
          %451 = sbr.rel (%p449) target = $region56
        $region55: #{tpu_custom_call.1} parent=19 // pred_region
          %p452 = scmp.lt.s32.totalorder %s29, 7
          %s453 = scalar_select %p452, %s29, 7
          %s454 = scalar_lea.vmem %s8, %s453
        $region56: #{tpu_custom_call.1} parent=19 // pred_fallthru
          _
        // Predicated region
        $region57: #{tpu_custom_call.1} parent=19 // pred_check
          %p455 = pneg %p306
        $region58: #{tpu_custom_call.1} parent=19 // pred_check_branch
          %457 = sbr.rel (%p455) target = $region60
        $region59: #{tpu_custom_call.1} parent=19 // pred_region
          %p458 = scmp.lt.s32.totalorder %s29, 7
          %s459 = scalar_select %p458, %s29, 7
          %s460 = smul.addr %s459, 4
          %s461 = scalar_lea.vmem %s9, %s460
        $region60: #{tpu_custom_call.1} parent=19 // pred_fallthru
          _
      $region20: #{tpu_custom_call.1} parent=5 // pred_fallthru
        _
      %p462 = scmp.le.s32.totalorder 1, %s20
      %p463 = scmp.lt.s32.totalorder %s20, 17
      %p464 = pnand %p462, %p463
      %p465 = pneg %p464
      // Predicated region
      $region61: #{tpu_custom_call.1} parent=5 // pred_check
        _
      $region62: #{tpu_custom_call.1} parent=5 // pred_check_branch
        %467 = sbr.rel (%p464) target = $region64
      $region63: #{tpu_custom_call.1} parent=5 // pred_region
        %s468 = ssub.s32 %s20, 1
        %p469 = scmp.lt.s32.totalorder %s31, 1
        %s470 = scalar_select %p469, %s31, 1
        %p471 = scmp.lt.s32.totalorder %s32, 0
        %s472 = scalar_select %p471, %s32, 0
        %s473 = sadd.s32 %s472, %s470
        %s474 = smul.addr %s473, 8
        %s475 = scalar_lea.vmem %s0, %s474
        %p476 = pneg %p74
        %p477 = pneg %p71
        %p478 = scmp.lt.s32.totalorder %s31, 1
        %s479 = scalar_select %p478, %s31, 1
        %p480 = scmp.lt.s32.totalorder %s34, 0
        %s481 = scalar_select %p480, %s34, 0
        %s482 = sadd.s32 %s481, %s479
        %s483 = smul.addr %s482, 8
        %s484 = scalar_lea.vmem %s1, %s483
        %p485 = pneg %p102
        %p486 = pneg %p99
        %p487 = scmp.lt.s32.totalorder %s31, 1
        %s488 = scalar_select %p487, %s31, 1
        %p489 = scmp.lt.s32.totalorder %s34, 0
        %s490 = scalar_select %p489, %s34, 0
        %s491 = sadd.s32 %s490, %s488
        %s492 = smul.addr %s491, 8
        %s493 = scalar_lea.vmem %s2, %s492
        %p494 = pneg %p130
        %p495 = pneg %p127
        %p496 = scmp.lt.s32.totalorder %s33, 7
        %s497 = scalar_select %p496, %s33, 7
        %s498 = smul.addr %s497, 4
        %s499 = smul.addr %s498, 8
        %s500 = scalar_lea.vmem %s3, %s499
        %p501 = pneg %p156
        %p502 = pneg %p153
        %p503 = scmp.lt.s32.totalorder %s33, 7
        %s504 = scalar_select %p503, %s33, 7
        %s505 = scalar_lea.vmem %s4, %s504
        %p506 = pneg %p182
        %p507 = pneg %p179
        %p508 = scmp.lt.s32.totalorder %s33, 7
        %s509 = scalar_select %p508, %s33, 7
        %s510 = smul.addr %s509, 4
        %s511 = smul.addr %s510, 8
        %s512 = scalar_lea.vmem %s5, %s511
        %p513 = pneg %p208
        %p514 = pneg %p205
        %p515 = scmp.lt.s32.totalorder %s33, 7
        %s516 = scalar_select %p515, %s33, 7
        %s517 = scalar_lea.vmem %s6, %s516
        %p518 = pneg %p234
        %p519 = pneg %p231
        %p520 = scmp.lt.s32.totalorder %s33, 7
        %s521 = scalar_select %p520, %s33, 7
        %s522 = smul.addr %s521, 4
        %s523 = smul.addr %s522, 8
        %s524 = scalar_lea.vmem %s7, %s523
        %p525 = pneg %p260
        %p526 = pneg %p257
        %p527 = scmp.lt.s32.totalorder %s33, 7
        %s528 = scalar_select %p527, %s33, 7
        %s529 = scalar_lea.vmem %s8, %s528
        %p530 = pneg %p286
        %p531 = pneg %p283
        %p532 = scmp.lt.s32.totalorder %s33, 7
        %s533 = scalar_select %p532, %s33, 7
        %s534 = smul.addr %s533, 4
        %s535 = scalar_lea.vmem %s9, %s534
        %p536 = pneg %p312
        %p537 = pneg %p309
        %p538 = pneg %p333
        %p539 = pneg %p330
        %p540 = pneg %p361
        %p541 = pneg %p358
        %s542 = sand.u32 %s348, 1
        %s543 = scalar_lea.sflag [#allocation8], %s542
        %s544 = sand.u32 %s348, 1
        %s545 = smul.addr %s544, 8
        %s546 = scalar_lea.vmem [#allocation7], %s545
        %p547 = scmp.lt.s32.totalorder %s31, 1
        %s548 = scalar_select %p547, %s31, 1
        %p549 = scmp.lt.s32.totalorder %s32, 0
        %s550 = scalar_select %p549, %s32, 0
        %s551 = sadd.s32 %s550, %s548
        %s552 = smul.addr %s551, 8
        %s553 = scalar_lea.vmem %s0, %s552
        %p554 = scmp.lt.s32.totalorder %s31, 1
        %s555 = scalar_select %p554, %s31, 1
        %p556 = scmp.lt.s32.totalorder %s34, 0
        %s557 = scalar_select %p556, %s34, 0
        %s558 = sadd.s32 %s557, %s555
        %s559 = smul.addr %s558, 8
        %s560 = scalar_lea.vmem %s1, %s559
        %p561 = scmp.lt.s32.totalorder %s31, 1
        %s562 = scalar_select %p561, %s31, 1
        %p563 = scmp.lt.s32.totalorder %s34, 0
        %s564 = scalar_select %p563, %s34, 0
        %s565 = sadd.s32 %s564, %s562
        %s566 = smul.addr %s565, 8
        %s567 = scalar_lea.vmem %s2, %s566
        %p568 = scmp.lt.s32.totalorder %s33, 7
        %s569 = scalar_select %p568, %s33, 7
        %s570 = smul.addr %s569, 4
        %s571 = smul.addr %s570, 8
        %s572 = scalar_lea.vmem %s3, %s571
        %p573 = scmp.lt.s32.totalorder %s33, 7
        %s574 = scalar_select %p573, %s33, 7
        %s575 = scalar_lea.vmem %s4, %s574
        %p576 = scmp.lt.s32.totalorder %s33, 7
        %s577 = scalar_select %p576, %s33, 7
        %s578 = smul.addr %s577, 4
        %s579 = smul.addr %s578, 8
        %s580 = scalar_lea.vmem %s5, %s579
        %p581 = scmp.lt.s32.totalorder %s33, 7
        %s582 = scalar_select %p581, %s33, 7
        %s583 = scalar_lea.vmem %s6, %s582
        %p584 = scmp.lt.s32.totalorder %s33, 7
        %s585 = scalar_select %p584, %s33, 7
        %s586 = smul.addr %s585, 4
        %s587 = smul.addr %s586, 8
        %s588 = scalar_lea.vmem %s7, %s587
        %p589 = scmp.lt.s32.totalorder %s33, 7
        %s590 = scalar_select %p589, %s33, 7
        %s591 = scalar_lea.vmem %s8, %s590
        %p592 = scmp.lt.s32.totalorder %s33, 7
        %s593 = scalar_select %p592, %s33, 7
        %s594 = smul.addr %s593, 4
        %s595 = scalar_lea.vmem %s9, %s594
        %p596 = scmp.eq.s32.totalorder %s34, 0
        // Predicated region
        $region65: #{tpu_custom_call.1} parent=63 // pred_check
          %p597 = pneg %p596
        $region66: #{tpu_custom_call.1} parent=63 // pred_check_branch
          %599 = sbr.rel (%p597) target = $region68
        $region67: #{tpu_custom_call.1} parent=63 // pred_region
          %v600 = vld [vmem:[%s553] sm:$0xff]
          %v601 = vld [vmem:[%s572] sm:$0xff]
          %v602 = vld [vmem:[%s572 + $0x8] sm:$0xff]
          %v603 = vld [vmem:[%s572 + $0x10] sm:$0xff]
          %v604 = vld [vmem:[%s572 + $0x18] sm:$0xff]
          %v605 = vld [vmem:[%s575] sm:$0x1]
          %v607 = vperm.slane %v605, 0
          %vm609 = vcmask 261120
          %v611 = vsel %vm609, %v600, 0
          %613 = vmatpush.msra.mxu0 0.0
          %614 = vmatpush.msra.mxu0 0.0
          %615 = vmatpush.msra.mxu0 0.0
          %616 = vmatpush.msra.mxu0 0.0
          %617 = vmatpush.msra.mxu0 0.0
          %618 = vmatpush.msra.mxu0 0.0
          %619 = vmatpush.msra.mxu0 0.0
          %620 = vmatpush.msra.mxu0 0.0
          %621 = vmatpush.msra.mxu0 0.0
          %622 = vmatpush.msra.mxu0 0.0
          %623 = vmatpush.msra.mxu0 0.0
          %624 = vmatpush.msra.mxu0 0.0
          %625 = vmatpush.msra.mxu0 %v604
          %626 = vmatpush.msra.mxu0 %v603
          %627 = vmatpush.msra.mxu0 %v602
          %628 = vmatpush.msra.mxu0 %v601
          %629 = vmatmul.f32.gmra.mxu0 %v611
          %v630 = vpop.f32.mrf.mxu0
          %v631 = vadd.f32 %v607, %v630
          %632 = vdwg.mxu0
          %v633 = vmul.f32 %v631, 0.5
          %vm634 = vcmask 31744
          %635 = vst.msk [vmem:[#allocation2] sm:$0xff] %vm634, %v633
          %vm636 = vcmask 7168
          %637 = vst.msk [vmem:[#allocation3] sm:$0xff] %vm636, -1e+30
          %638 = vst.msk [vmem:[#allocation4] sm:$0xff] %vm636, 0.0
          %639 = vst.msk [vmem:[#allocation5] sm:$0xff] %vm634, 0.0
        $region68: #{tpu_custom_call.1} parent=63 // pred_fallthru
          _
        %v640 = vld [vmem:[%s560] sm:$0xff]
        %v641 = vld [vmem:[%s580] sm:$0xff]
        %v642 = vld [vmem:[%s580 + $0x8] sm:$0xff]
        %v643 = vld [vmem:[%s580 + $0x10] sm:$0xff]
        %v644 = vld [vmem:[%s580 + $0x18] sm:$0xff]
        %v645 = vld [vmem:[%s583] sm:$0x1]
        %v647 = vperm.slane %v645, 0
        %vm649 = vcmask 261120
        %v651 = vsel %vm649, %v640, 0
        %653 = vmatpush.msra.mxu0 0.0
        %654 = vmatpush.msra.mxu0 0.0
        %655 = vmatpush.msra.mxu0 0.0
        %656 = vmatpush.msra.mxu0 0.0
        %657 = vmatpush.msra.mxu0 0.0
        %658 = vmatpush.msra.mxu0 0.0
        %659 = vmatpush.msra.mxu0 0.0
        %660 = vmatpush.msra.mxu0 0.0
        %661 = vmatpush.msra.mxu0 0.0
        %662 = vmatpush.msra.mxu0 0.0
        %663 = vmatpush.msra.mxu0 0.0
        %664 = vmatpush.msra.mxu0 0.0
        %665 = vmatpush.msra.mxu0 %v644
        %666 = vmatpush.msra.mxu0 %v643
        %667 = vmatpush.msra.mxu0 %v642
        %668 = vmatpush.msra.mxu0 %v641
        %669 = vmatmul.f32.gmra.mxu0 %v651
        %v670 = vpop.f32.mrf.mxu0
        %v671 = vadd.f32 %v647, %v670
        %672 = vdwg.mxu0
        %v673 = vld [vmem:[%s567] sm:$0xff]
        %v674 = vld [vmem:[%s588] sm:$0xff]
        %v675 = vld [vmem:[%s588 + $0x8] sm:$0xff]
        %v676 = vld [vmem:[%s588 + $0x10] sm:$0xff]
        %v677 = vld [vmem:[%s588 + $0x18] sm:$0xff]
        %v678 = vld [vmem:[%s591] sm:$0x1]
        %v680 = vperm.slane %v678, 0
        %v683 = vsel %vm649, %v673, 0
        %685 = vmatpush.msra.mxu0 0.0
        %686 = vmatpush.msra.mxu0 0.0
        %687 = vmatpush.msra.mxu0 0.0
        %688 = vmatpush.msra.mxu0 0.0
        %689 = vmatpush.msra.mxu0 0.0
        %690 = vmatpush.msra.mxu0 0.0
        %691 = vmatpush.msra.mxu0 0.0
        %692 = vmatpush.msra.mxu0 0.0
        %693 = vmatpush.msra.mxu0 0.0
        %694 = vmatpush.msra.mxu0 0.0
        %695 = vmatpush.msra.mxu0 0.0
        %696 = vmatpush.msra.mxu0 0.0
        %697 = vmatpush.msra.mxu0 %v677
        %698 = vmatpush.msra.mxu0 %v676
        %699 = vmatpush.msra.mxu0 %v675
        %700 = vmatpush.msra.mxu0 %v674
        %701 = vmatmul.f32.gmra.mxu0 %v683
        %v702 = vpop.f32.mrf.mxu0
        %v703 = vadd.f32 %v680, %v702
        %704 = vdwg.mxu0
        %v705 = vld [vmem:[#allocation2] sm:$0xff]
        %vm706 = vcmask 31744
        %v708 = vsel %vm706, %v705, 0
        %v711 = vsel %vm706, %v671, 0
        %713 = vmatpush.xpose.msra.mxu0 0.0
        %714 = vmatpush.xpose.msra.mxu0 0.0
        %715 = vmatpush.xpose.msra.mxu0 0.0
        %716 = vmatpush.xpose.msra.mxu0 0.0
        %717 = vmatpush.xpose.msra.mxu0 0.0
        %718 = vmatpush.xpose.msra.mxu0 0.0
        %719 = vmatpush.xpose.msra.mxu0 0.0
        %720 = vmatpush.xpose.msra.mxu0 0.0
        %721 = vmatpush.xpose.msra.mxu0 0.0
        %722 = vmatpush.xpose.msra.mxu0 0.0
        %723 = vmatpush.xpose.msra.mxu0 0.0
        %724 = vmatpush.xpose.msra.mxu0 0.0
        %725 = vmatpush.xpose.msra.mxu0 0.0
        %726 = vmatpush.xpose.msra.mxu0 0.0
        %727 = vmatpush.xpose.msra.mxu0 0.0
        %728 = vmatpush.xpose.msra.mxu0 %v711
        %729 = vmatmul.f32.gmra.mxu0 %v708
        %v730 = vpop.f32.mrf.mxu0
        %v731 = vadd.f32 0.0, %v730
        %732 = vdwg.mxu0
        %v733 = vld [vmem:[#allocation3] sm:$0xff]
        %vm734 = vcmask 64512
        %v735 = vsel %vm734, %v731, -inf
        %736 = vmax.xlane.f32.xlu0 %v735
        %v737 = vpop.xlane.xlu0 %736
        %v738 = vmax.f32 %v733, %v737
        %v739 = vsub.f32 %v733, %v738
        %v740 = vmul.f32 %v739, 1.442695
        %v741 = vpow.pop %v740
        %743 = vset.pattern.permute.xlu0 0
        %744 = vperm.xlu0 %743, %v738
        %v745 = vpop.permute.xlu0 %744
        %v747 = vsub.f32 %v731, %v745
        %v748 = vmul.f32 %v747, 1.442695
        %v749 = vpow.pop %v748
        %v750 = vld [vmem:[#allocation4] sm:$0xff]
        %v751 = vmul.f32 %v741, %v750
        %v752 = vsel %vm734, %v749, 0.0
        %753 = vadd.xlane.f32.xlu0 %v752
        %v754 = vpop.xlane.xlu0 %753
        %v755 = vadd.f32 %v751, %v754
        %vm756 = vcmask 7168
        %757 = vst.msk [vmem:[#allocation4] sm:$0xff] %vm756, %v755
        %v758 = vld [vmem:[#allocation5] sm:$0xff]
        %760 = vset.pattern.permute.xlu0 0
        %761 = vperm.xlu0 %760, %v741
        %v762 = vpop.permute.xlu0 %761
        %v764 = vmul.f32 %v762, %v758
        %v766 = vsel %vm734, %v749, 0
        %768 = vmatpush.msra.mxu0 0.0
        %769 = vmatpush.msra.mxu0 0.0
        %770 = vmatpush.msra.mxu0 0.0
        %771 = vmatpush.msra.mxu0 0.0
        %772 = vmatpush.msra.mxu0 0.0
        %773 = vmatpush.msra.mxu0 0.0
        %774 = vmatpush.msra.mxu0 0.0
        %775 = vmatpush.msra.mxu0 0.0
        %776 = vmatpush.msra.mxu0 0.0
        %777 = vmatpush.msra.mxu0 0.0
        %778 = vmatpush.msra.mxu0 0.0
        %779 = vmatpush.msra.mxu0 0.0
        %780 = vmatpush.msra.mxu0 0.0
        %781 = vmatpush.msra.mxu0 0.0
        %782 = vmatpush.msra.mxu0 0.0
        %783 = vmatpush.msra.mxu0 %v703
        %784 = vmatmul.f32.gmra.mxu0 %v766
        %v785 = vpop.f32.mrf.mxu0
        %v786 = vadd.f32 0.0, %v785
        %787 = vdwg.mxu0
        %v788 = vadd.f32 %v764, %v786
        %789 = vst.msk [vmem:[#allocation5] sm:$0xff] %vm706, %v788
        %790 = vst.msk [vmem:[#allocation3] sm:$0xff] %vm756, %v738
        %p791 = scmp.eq.s32.totalorder %s33, 0
        %p792 = pnand %p596, %p791
        %p793 = pneg %p792
        // Predicated region
        $region69: #{tpu_custom_call.1} parent=63 // pred_check
          _
        $region70: #{tpu_custom_call.1} parent=63 // pred_check_branch
          %795 = sbr.rel (%p792) target = $region72
        $region71: #{tpu_custom_call.1} parent=63 // pred_region
          %796 = vst.msk [vmem:[#allocation6] sm:$0xff] %vm649, 0.0
        $region72: #{tpu_custom_call.1} parent=63 // pred_fallthru
          _
        // Predicated region
        $region73: #{tpu_custom_call.1} parent=63 // pred_check
          %p797 = pneg %p596
        $region74: #{tpu_custom_call.1} parent=63 // pred_check_branch
          %799 = sbr.rel (%p797) target = $region76
        $region75: #{tpu_custom_call.1} parent=63 // pred_region
          %v800 = vld [vmem:[#allocation4] sm:$0xff]
          %v801 = vrcp.pop %v800
          %v802 = vmul.f32 %v800, %v801
          %v803 = vsub.f32 2.0, %v802
          %v804 = vmul.f32 %v801, %v803
          %v805 = vld [vmem:[#allocation5] sm:$0xff]
          %807 = vset.pattern.permute.xlu0 0
          %808 = vperm.xlu0 %807, %v804
          %v809 = vpop.permute.xlu0 %808
          %v811 = vmul.f32 %v805, %v809
          %v812 = vld [vmem:[#allocation6] sm:$0xff]
          %v813 = vld [vmem:[%s595] sm:$0xf]
          %v815 = vsel %vm706, %v811, 0
          %vm817 = vcmask 1043456
          %v819 = vsel %vm817, %v813, 0
          %821 = vmatpush.msra.mxu0 0.0
          %822 = vmatpush.msra.mxu0 0.0
          %823 = vmatpush.msra.mxu0 0.0
          %824 = vmatpush.msra.mxu0 0.0
          %825 = vmatpush.msra.mxu0 0.0
          %826 = vmatpush.msra.mxu0 0.0
          %827 = vmatpush.msra.mxu0 0.0
          %828 = vmatpush.msra.mxu0 0.0
          %829 = vmatpush.msra.mxu0 0.0
          %830 = vmatpush.msra.mxu0 0.0
          %831 = vmatpush.msra.mxu0 0.0
          %832 = vmatpush.msra.mxu0 0.0
          %833 = vmatpush.msra.mxu0 0.0
          %834 = vmatpush.msra.mxu0 0.0
          %835 = vmatpush.msra.mxu0 0.0
          %836 = vmatpush.msra.mxu0 %v819
          %837 = vmatmul.f32.gmra.mxu0 %v815
          %v838 = vpop.f32.mrf.mxu0
          %v839 = vadd.f32 0.0, %v838
          %840 = vdwg.mxu0
          %v841 = vadd.f32 %v812, %v839
          %842 = vst.msk [vmem:[#allocation6] sm:$0xff] %vm649, %v841
        $region76: #{tpu_custom_call.1} parent=63 // pred_fallthru
          _
        %p843 = scmp.eq.s32.totalorder %s33, 7
        %p844 = pnand %p596, %p843
        %p845 = pneg %p844
        // Predicated region
        $region77: #{tpu_custom_call.1} parent=63 // pred_check
          _
        $region78: #{tpu_custom_call.1} parent=63 // pred_check_branch
          %847 = sbr.rel (%p844) target = $region80
        $region79: #{tpu_custom_call.1} parent=63 // pred_region
          %v848 = vld [vmem:[#allocation6] sm:$0xff]
          %v849 = vld [vmem:[%s10] sm:$0x1]
          %v851 = vperm.slane %v849, 0
          %v853 = vadd.f32 %v848, %v851
          %854 = vst.msk [vmem:[%s546] sm:$0xff] %vm649, %v853
        $region80: #{tpu_custom_call.1} parent=63 // pred_fallthru
          _
        %s855 = sand.u32 %s348, 1
        %s856 = scalar_lea.sflag [#allocation8], %s855
        %s857 = sand.u32 %s348, 1
        %s858 = smul.addr %s857, 8
        %s859 = scalar_lea.vmem [#allocation7], %s858
        // Predicated region
        $region81: #{tpu_custom_call.1} parent=63 // pred_check
          %p860 = pneg %p358
        $region82: #{tpu_custom_call.1} parent=63 // pred_check_branch
          %862 = sbr.rel (%p860) target = $region84
        $region83: #{tpu_custom_call.1} parent=63 // pred_region
          %864 = vsyncadd %s856, 0
          %s865 = sadd.s32 %s32, %s31
          %s866 = smul.addr %s865, 8
          %s867 = scalar_lea.hbm %s11, %s866
          %s869 = sshll.u32 %s859, 4
          %s870 = int_to_ptr.vmem [resolvable:$true] %s869
          %s871 = sshll.u32 %s867, 4
          %s872 = int_to_ptr.hbm [resolvable:$true] %s871
          %874 = dma.vmem_to_hbm [thread:$0]  %s870, 128, %s872, %s856
        $region84: #{tpu_custom_call.1} parent=63 // pred_fallthru
          _
      $region64: #{tpu_custom_call.1} parent=5 // pred_fallthru
        _
      %p875 = scmp.le.s32.totalorder 2, %s20
      // Predicated region
      $region85: #{tpu_custom_call.1} parent=5 // pred_check
        %p876 = pneg %p875
      $region86: #{tpu_custom_call.1} parent=5 // pred_check_branch
        %878 = sbr.rel (%p876) target = $region88
      $region87: #{tpu_custom_call.1} parent=5 // pred_region
        %s879 = ssub.s32 %s20, 2
        // Predicated region
        $region89: #{tpu_custom_call.1} parent=87 // pred_check
          %p880 = pneg %p364
        $region90: #{tpu_custom_call.1} parent=87 // pred_check_branch
          %882 = sbr.rel (%p880) target = $region92
        $region91: #{tpu_custom_call.1} parent=87 // pred_region
          %s883 = sand.u32 %s349, 1
          %s884 = scalar_lea.sflag [#allocation8], %s883
          %s885 = sand.u32 %s349, 1
          %s886 = smul.addr %s885, 8
          %s887 = scalar_lea.vmem [#allocation7], %s886
          %889 = dma.done %s884, 128
        $region92: #{tpu_custom_call.1} parent=87 // pred_fallthru
          _
      $region88: #{tpu_custom_call.1} parent=5 // pred_fallthru
        _
    $region6: #{tpu_custom_call.1} parent=1 // loop_footer
      %s24 = sadd.s32 1, %s20
    $region7: #{tpu_custom_call.1} parent=1 // loop_footer_branch
      %19 = sbr.rel target = $region3
    $region8: #{tpu_custom_call.1} parent=1 // loop_exit
      _
    %890 = vsyncpa [#allocation8], 1
    %s891 = scalar_lea.sflag [#allocation8], 1
    %892 = vsyncpa %s891, 1

</llo_original>
